<compile_context>
chip_gen: v7x
topology: tpu7x:2x2x1
jax: 0.10.0
libtpu: 0.0.40
codegen_flags: <defaults>
</compile_context>

<pallas_src>
import functools
from typing import NamedTuple

import jax
import jax.numpy as jnp
import numpy as np
from jax.experimental import pallas as pl
from jax.experimental.pallas import tpu as pltpu


def _round_up(v, m):
    return (v + m - 1) // m * m


def _cdiv(a, b):
    return (a + b - 1) // b


def _sublane_multiple(dtype) -> int:
    # Required multiple for the second-to-last block dim: 8 (f32), 16 (bf16), 32 (int8).
    return max(8, 32 // np.dtype(dtype).itemsize)


def _vmem_cap_bytes() -> int:
    # ~85% of this generation's VMEM (128 MiB on v5e/v6e, 64 MiB per TC on v7x).
    try:
        cap = int(pltpu.get_tpu_info().vmem_capacity_bytes)
    except Exception:
        cap = 64 << 20
    return int(0.85 * cap)


# --------------------------------------------------------------------------- kernels
def _fused_kernel(x_ref, w1_ref, b1_ref, w2_ref, b2_ref, o_ref, *, compute_dtype):
    """Whole-weight-resident path: ff2(relu(ff1(x))) for one token tile."""
    x = x_ref[...].astype(compute_dtype)
    h = jnp.dot(x, w1_ref[...], preferred_element_type=jnp.float32)
    h = jnp.maximum(h + b1_ref[...], 0.0)                       # bias + ReLU in f32
    out = jnp.dot(h.astype(compute_dtype), w2_ref[...],
                  preferred_element_type=jnp.float32)
    o_ref[...] = (out + b2_ref[...]).astype(o_ref.dtype)


def _ktiled_kernel(x_ref, w1_ref, b1_ref, w2_ref, b2_ref, o_ref, acc_ref, *,
                   compute_dtype):
    """Mid/K-tiled path: W1 column chunk + matching W2 row chunk per grid step,
    ff2 partial products accumulated in an f32 VMEM scratch."""
    k = pl.program_id(1)

    @pl.when(k == 0)
    def _():
        acc_ref[...] = jnp.zeros_like(acc_ref)

    x = x_ref[...].astype(compute_dtype)
    h = jnp.dot(x, w1_ref[...], preferred_element_type=jnp.float32)
    h = jnp.maximum(h + b1_ref[...], 0.0)
    acc_ref[...] += jnp.dot(h.astype(compute_dtype), w2_ref[...],
                            preferred_element_type=jnp.float32)

    @pl.when(k == pl.num_programs(1) - 1)
    def _():
        o_ref[...] = (acc_ref[...] + b2_ref[...]).astype(o_ref.dtype)


# ------------------------------------------------------------------------ planning
class SublayerPlan(NamedTuple):
    in_f: int
    mid: int
    out_f: int
    mid_p: int
    out_p: int
    tm: int
    tk: int
    k_steps: int
    vmem_limit: int
    compute_dtype: object
    out_dtype: object


def plan_sublayer(n_tok, in_f, mid, out_f, x_dtype, *, tm=512,
                  compute_dtype=jnp.bfloat16, out_dtype=None, force_tk=None):
    """Static (Python-time) tiling plan; compute once at model init."""
    out_dtype = x_dtype if out_dtype is None else out_dtype
    x_bytes = np.dtype(x_dtype).itemsize
    o_bytes = np.dtype(out_dtype).itemsize
    w_bytes = np.dtype(compute_dtype).itemsize

    mid_p = _round_up(mid, 128)
    # Lane-dense output; skip padding (and the post-call slice) when already aligned.
    out_p = out_f if out_f % 128 == 0 else _round_up(out_f, 128)

    sub = max(_sublane_multiple(x_dtype), _sublane_multiple(out_dtype))
    tm = _round_up(tm, sub)
    # Keep >=2 token-grid steps on medium batches so both v7x TensorCores get work.
    if n_tok >= 512:
        tm = min(tm, _round_up(_cdiv(n_tok, 2), 256))
    tm = max(sub, min(tm, _round_up(n_tok, sub)))

    cap = _vmem_cap_bytes()

    def need(tm_, tk_, k_steps_):
        buf_w = 1 if k_steps_ == 1 else 2       # resident weights single-buffered
        return (2 * tm_ * in_f * x_bytes                       # x tile (double-buffered)
                + 2 * tm_ * out_p * o_bytes                    # out tile (double-buffered)
                + buf_w * (in_f * tk_ + tk_ * out_p) * w_bytes  # W1 + W2 chunks
                + buf_w * tk_ * 4 + out_p * 4                  # f32 biases
                + tm_ * tk_ * 4                                # f32 hidden intermediate
                + tm_ * out_p * 4)                             # f32 result / accumulator

    if force_tk is not None:                     # test/override hook
        tk = _round_up(force_tk, 128)
        k_steps = _cdiv(mid_p, tk)
    else:
        tk, k_steps = mid_p, 1
        # Shrink the mid (K of ff2) tile first, then the token tile, until we fit.
        while need(tm, tk, k_steps) > cap:
            if tk > 512:
                tk = _round_up(max(512, tk // 2), 128)
                k_steps = _cdiv(mid_p, tk)
            elif tm > 4 * sub:
                tm = max(sub, _round_up(tm // 2, sub))
            else:
                break                            # tiny tiles already; let Mosaic try

    if k_steps > 1:
        # Pad mid so the K tiles divide evenly (zero padding is mathematically inert).
        mid_p = _round_up(mid_p, tk)
        k_steps = mid_p // tk
    else:
        tk = mid_p

    vmem_limit = int(min(cap, max(int(1.5 * need(tm, tk, k_steps)), 32 << 20)))
    return SublayerPlan(in_f, mid, out_f, mid_p, out_p, tm, tk, k_steps,
                        vmem_limit, compute_dtype, out_dtype)


def prepare_sublayer_params(plan, w1, b1, w2, b2):
    """Pad / cast the parameters ONCE (outside the per-call hot path).

    w1: [in_f, mid]   (transposed PyTorch ff1.weight), b1: [mid]
    w2: [mid, out_f]  (transposed PyTorch ff2.weight), b2: [out_f]
    """
    cd = plan.compute_dtype
    w1p = jnp.pad(w1.astype(cd), ((0, 0), (0, plan.mid_p - plan.mid)))
    b1p = jnp.pad(b1.astype(jnp.float32),
                  ((0, plan.mid_p - plan.mid),)).reshape(1, plan.mid_p)
    w2p = jnp.pad(w2.astype(cd),
                  ((0, plan.mid_p - plan.mid), (0, plan.out_p - plan.out_f)))
    b2p = jnp.pad(b2.astype(jnp.float32),
                  ((0, plan.out_p - plan.out_f),)).reshape(1, plan.out_p)
    return w1p, b1p, w2p, b2p


# ------------------------------------------------------------------------ execution
def _build_call(plan, n_tok, single_buffer_resident):
    in_f, tm, tk = plan.in_f, plan.tm, plan.tk
    mid_p, out_p = plan.mid_p, plan.out_p
    gi = _cdiv(n_tok, tm)
    res_kw = ({"pipeline_mode": pl.Buffered(1)} if single_buffer_resident else {})

    if plan.k_steps == 1:
        grid = (gi,)
        in_specs = [
            pl.BlockSpec((tm, in_f), lambda i: (i, 0)),                     # x tile
            pl.BlockSpec((in_f, mid_p), lambda i: (0, 0), **res_kw),        # W1 (resident)
            pl.BlockSpec((1, mid_p), lambda i: (0, 0), **res_kw),           # b1
            pl.BlockSpec((mid_p, out_p), lambda i: (0, 0), **res_kw),       # W2 (resident)
            pl.BlockSpec((1, out_p), lambda i: (0, 0), **res_kw),           # b2
        ]
        out_specs = pl.BlockSpec((tm, out_p), lambda i: (i, 0))
        kernel = functools.partial(_fused_kernel, compute_dtype=plan.compute_dtype)
        scratch = []
        sem = ("parallel",)
    else:
        grid = (gi, plan.k_steps)                                           # K last
        in_specs = [
            pl.BlockSpec((tm, in_f), lambda i, k: (i, 0)),                  # x tile
            pl.BlockSpec((in_f, tk), lambda i, k: (0, k)),                  # W1 K-chunk
            pl.BlockSpec((1, tk), lambda i, k: (0, k)),                     # b1 K-chunk
            pl.BlockSpec((tk, out_p), lambda i, k: (k, 0)),                 # W2 K-chunk
            pl.BlockSpec((1, out_p), lambda i, k: (0, 0), **res_kw),        # b2
        ]
        out_specs = pl.BlockSpec((tm, out_p), lambda i, k: (i, 0))
        kernel = functools.partial(_ktiled_kernel, compute_dtype=plan.compute_dtype)
        scratch = [pltpu.VMEM((tm, out_p), jnp.float32)]
        sem = ("parallel", "arbitrary")

    return pl.pallas_call(
        kernel,
        out_shape=jax.ShapeDtypeStruct((n_tok, out_p), plan.out_dtype),
        grid=grid,
        in_specs=in_specs,
        out_specs=out_specs,
        scratch_shapes=scratch,
        compiler_params=pltpu.CompilerParams(
            dimension_semantics=sem, vmem_limit_bytes=plan.vmem_limit),
    )


def apply_sublayer(plan, x, params):
    """Hot path: only the pallas_call (weights already padded/cast)."""
    w1p, b1p, w2p, b2p = params
    xf = x.reshape(-1, plan.in_f)
    n_tok = xf.shape[0]
    try:
        out = _build_call(plan, n_tok, True)(xf, w1p, b1p, w2p, b2p)
    except Exception:
        # Fallback for JAX builds without BlockSpec pipeline_mode / Buffered(1).
        out = _build_call(plan, n_tok, False)(xf, w1p, b1p, w2p, b2p)
    if plan.out_p != plan.out_f:
        # TODO(synk): expose the 128-padded layout to downstream consumers to avoid
        # this extra HBM round-trip when out_features is not 128-aligned.
        out = out[:, :plan.out_f]
    return out.reshape(*x.shape[:-1], plan.out_f)


def base_sublayer(x, w1, b1, w2, b2, *, tm=512, compute_dtype=jnp.bfloat16,
                  out_dtype=None):
    """One-shot convenience wrapper (plans + pads weights per call).

    In a real model, call plan_sublayer / prepare_sublayer_params once at init and
    reuse them via apply_sublayer — the per-call weight prep here is only for
    standalone use and tests.
    """
    n_tok = int(np.prod(x.shape[:-1]))
    plan = plan_sublayer(n_tok, x.shape[-1], w1.shape[1], w2.shape[1], x.dtype,
                         tm=tm, compute_dtype=compute_dtype, out_dtype=out_dtype)
    params = prepare_sublayer_params(plan, w1, b1, w2, b2)
    return apply_sublayer(plan, x, params)


def reference(x, w1, b1, w2, b2):
    return jax.nn.relu(x @ w1 + b1) @ w2 + b2


if __name__ == "__main__":
    # Small shapes consistent with the module.
    batch, seq = 2, 8
    in_features, mid_features, out_features = 32, 16, 32

    key = jax.random.PRNGKey(0)
    k_x, k_w1, k_b1, k_w2, k_b2 = jax.random.split(key, 5)

    x = jax.random.normal(k_x, (batch, seq, in_features), dtype=jnp.float32)

    # ff1 = nn.Linear(in, mid): PyTorch weight [mid, in], bias [mid], U(+-1/sqrt(in)).
    bound1 = 1.0 / np.sqrt(in_features)
    w1_pt = jax.random.uniform(k_w1, (mid_features, in_features),
                               minval=-bound1, maxval=bound1, dtype=jnp.float32)
    b1 = jax.random.uniform(k_b1, (mid_features,),
                            minval=-bound1, maxval=bound1, dtype=jnp.float32)
    w1 = w1_pt.T  # [in, mid] for row-major matmul in the kernel

    # ff2 = nn.Linear(mid, out): weight zero-initialized per the module
    # (ff2.weight.data.zero_()); bias keeps its default uniform init.
    bound2 = 1.0 / np.sqrt(mid_features)
    w2 = jnp.zeros((mid_features, out_features), dtype=jnp.float32)
    b2 = jax.random.uniform(k_b2, (out_features,),
                            minval=-bound2, maxval=bound2, dtype=jnp.float32)

    y_ref = reference(x, w1, b1, w2, b2)

    # Exact-semantics check: f32 compute path.
    y_f32 = jax.block_until_ready(
        base_sublayer(x, w1, b1, w2, b2, compute_dtype=jnp.float32))
    assert y_f32.shape == (batch, seq, out_features)
    np.testing.assert_allclose(np.asarray(y_f32), np.asarray(y_ref),
                               rtol=1e-5, atol=1e-5)

    # Default fast path: bf16 operands, f32 accumulation.
    y_bf16 = jax.block_until_ready(base_sublayer(x, w1, b1, w2, b2))
    np.testing.assert_allclose(np.asarray(y_bf16), np.asarray(y_ref),
                               rtol=5e-2, atol=5e-2)

    # Hoisted weight prep: plan + pad/cast once, reuse across calls.
    plan = plan_sublayer(batch * seq, in_features, mid_features, out_features, x.dtype)
    params = prepare_sublayer_params(plan, w1, b1, w2, b2)
    y_prep = jax.block_until_ready(apply_sublayer(plan, x, params))
    np.testing.assert_allclose(np.asarray(y_prep), np.asarray(y_ref),
                               rtol=5e-2, atol=5e-2)

    # Nonzero-W2 sanity check (the module's zero init makes ff2's matmul trivial).
    w2_nz = 0.1 * jax.random.normal(k_w2, (mid_features, out_features),
                                    dtype=jnp.float32)
    y2_ref = reference(x, w1, b1, w2_nz, b2)
    y2_f32 = jax.block_until_ready(
        base_sublayer(x, w1, b1, w2_nz, b2, compute_dtype=jnp.float32))
    np.testing.assert_allclose(np.asarray(y2_f32), np.asarray(y2_ref),
                               rtol=1e-5, atol=1e-5)
    y2_bf16 = jax.block_until_ready(base_sublayer(x, w1, b1, w2_nz, b2))
    np.testing.assert_allclose(np.asarray(y2_bf16), np.asarray(y2_ref),
                               rtol=5e-2, atol=5e-2)

    # K-tiled reduction path, exercised with a forced small tk (in production it
    # triggers automatically once resident weights would exceed the VMEM cap).
    mid_k = 384
    w1k = 0.1 * jax.random.normal(k_w2, (in_features, mid_k), dtype=jnp.float32)
    b1k = 0.1 * jax.random.normal(k_b1, (mid_k,), dtype=jnp.float32)
    w2k = 0.1 * jax.random.normal(k_b2, (mid_k, out_features), dtype=jnp.float32)
    b2k = 0.5 * jnp.ones((out_features,), jnp.float32)
    plan_k = plan_sublayer(batch * seq, in_features, mid_k, out_features, x.dtype,
                           compute_dtype=jnp.float32, force_tk=128)
    assert plan_k.k_steps == 3, plan_k
    params_k = prepare_sublayer_params(plan_k, w1k, b1k, w2k, b2k)
    yk = jax.block_until_ready(apply_sublayer(plan_k, x, params_k))
    np.testing.assert_allclose(np.asarray(yk),
                               np.asarray(reference(x, w1k, b1k, w2k, b2k)),
                               rtol=2e-4, atol=2e-4)

    print("KERNEL_OK")
</pallas_src>

<mosaic_0001>
module attributes {stable_mosaic.version = 11 : i64} {
  func.func @_fused_kernel(%arg0: i32, %arg1: memref<16x32xf32, #tpu.memory_space<vmem>>, %arg2: memref<32x128xf32, #tpu.memory_space<vmem>>, %arg3: memref<1x128xf32, #tpu.memory_space<vmem>>, %arg4: memref<128x128xf32, #tpu.memory_space<vmem>>, %arg5: memref<1x128xf32, #tpu.memory_space<vmem>>, %arg6: memref<16x128xf32, #tpu.memory_space<vmem>>) attributes {dimension_semantics = [#tpu.dimension_semantics<parallel>], iteration_bounds = array<i64: 1>, scalar_prefetch = 0 : i64, scratch_operands = 0 : i64, tpu.core_type = #tpu.core_type<tc>, window_params = [{transform_indices = @transform_0, window_bounds = array<i64: 16, 32>}, {pipeline_mode = #tpu.pipeline_mode<synchronous>, transform_indices = @transform_1, window_bounds = array<i64: 32, 128>}, {pipeline_mode = #tpu.pipeline_mode<synchronous>, transform_indices = @transform_2, window_bounds = array<i64: 1, 128>}, {pipeline_mode = #tpu.pipeline_mode<synchronous>, transform_indices = @transform_3, window_bounds = array<i64: 128, 128>}, {pipeline_mode = #tpu.pipeline_mode<synchronous>, transform_indices = @transform_4, window_bounds = array<i64: 1, 128>}, {transform_indices = @transform_5, window_bounds = array<i64: 16, 128>}]} {
    %c0 = arith.constant 0 : index
    %c0_0 = arith.constant 0 : index
    %0 = vector.load %arg1[%c0, %c0_0] : memref<16x32xf32, #tpu.memory_space<vmem>>, vector<16x32xf32>
    %c0_1 = arith.constant 0 : index
    %c0_2 = arith.constant 0 : index
    %1 = vector.load %arg2[%c0_1, %c0_2] : memref<32x128xf32, #tpu.memory_space<vmem>>, vector<32x128xf32>
    %cst = arith.constant dense<0.000000e+00> : vector<16x128xf32>
    %2 = tpu.matmul %0, %1, %cst {dimension_numbers = #tpu.dot_dimension_numbers<[1], [0], [0], [1], [0, 0, 1, 1], [], []>} : vector<16x32xf32>, vector<32x128xf32>, vector<16x128xf32> -> vector<16x128xf32>
    %c0_3 = arith.constant 0 : index
    %c0_4 = arith.constant 0 : index
    %3 = vector.load %arg3[%c0_3, %c0_4] : memref<1x128xf32, #tpu.memory_space<vmem>>, vector<1x128xf32>
    %4 = vector.broadcast %3 : vector<1x128xf32> to vector<16x128xf32>
    %5 = arith.addf %2, %4 : vector<16x128xf32>
    %cst_5 = arith.constant 0.000000e+00 : f32
    %6 = vector.broadcast %cst_5 : f32 to vector<16x128xf32>
    %7 = arith.maximumf %5, %6 : vector<16x128xf32>
    %c0_6 = arith.constant 0 : index
    %c0_7 = arith.constant 0 : index
    %8 = vector.load %arg4[%c0_6, %c0_7] : memref<128x128xf32, #tpu.memory_space<vmem>>, vector<128x128xf32>
    %cst_8 = arith.constant dense<0.000000e+00> : vector<16x128xf32>
    %9 = tpu.matmul %7, %8, %cst_8 {dimension_numbers = #tpu.dot_dimension_numbers<[1], [0], [0], [1], [0, 0, 1, 1], [], []>} : vector<16x128xf32>, vector<128x128xf32>, vector<16x128xf32> -> vector<16x128xf32>
    %c0_9 = arith.constant 0 : index
    %c0_10 = arith.constant 0 : index
    %10 = vector.load %arg5[%c0_9, %c0_10] : memref<1x128xf32, #tpu.memory_space<vmem>>, vector<1x128xf32>
    %11 = vector.broadcast %10 : vector<1x128xf32> to vector<16x128xf32>
    %12 = arith.addf %9, %11 : vector<16x128xf32>
    %c0_11 = arith.constant 0 : index
    %c0_12 = arith.constant 0 : index
    %13 = vector.load %arg6[%c0_11, %c0_12] : memref<16x128xf32, #tpu.memory_space<vmem>>, vector<16x128xf32>
    tpu.vector_store %arg6[%c0_11, %c0_12], %12 {strides = array<i32>} : memref<16x128xf32, #tpu.memory_space<vmem>>, vector<16x128xf32>,
    return
  }
  func.func @transform_0(%arg0: i32) -> (i32, i32) {
    %c0_i32 = arith.constant 0 : i32
    %c0_i32_0 = arith.constant 0 : i32
    return %arg0, %c0_i32 : i32, i32
  }
  func.func @transform_1(%arg0: i32) -> (i32, i32) {
    %c0_i32 = arith.constant 0 : i32
    %c0_i32_0 = arith.constant 0 : i32
    %c0_i32_1 = arith.constant 0 : i32
    return %c0_i32, %c0_i32_0 : i32, i32
  }
  func.func @transform_2(%arg0: i32) -> (i32, i32) {
    %c0_i32 = arith.constant 0 : i32
    %c0_i32_0 = arith.constant 0 : i32
    %c0_i32_1 = arith.constant 0 : i32
    return %c0_i32, %c0_i32_0 : i32, i32
  }
  func.func @transform_3(%arg0: i32) -> (i32, i32) {
    %c0_i32 = arith.constant 0 : i32
    %c0_i32_0 = arith.constant 0 : i32
    %c0_i32_1 = arith.constant 0 : i32
    return %c0_i32, %c0_i32_0 : i32, i32
  }
  func.func @transform_4(%arg0: i32) -> (i32, i32) {
    %c0_i32 = arith.constant 0 : i32
    %c0_i32_0 = arith.constant 0 : i32
    %c0_i32_1 = arith.constant 0 : i32
    return %c0_i32, %c0_i32_0 : i32, i32
  }
  func.func @transform_5(%arg0: i32) -> (i32, i32) {
    %c0_i32 = arith.constant 0 : i32
    %c0_i32_0 = arith.constant 0 : i32
    return %arg0, %c0_i32 : i32, i32
  }
}

module attributes {stable_mosaic.version = 11 : i64} {
  func.func @_fused_kernel(%arg0: i32, %arg1: memref<16x32xf32, #tpu.memory_space<vmem>>, %arg2: memref<32x128xf32, #tpu.memory_space<vmem>>, %arg3: memref<1x128xf32, #tpu.memory_space<vmem>>, %arg4: memref<128x128xf32, #tpu.memory_space<vmem>>, %arg5: memref<1x128xf32, #tpu.memory_space<vmem>>, %arg6: memref<16x128xf32, #tpu.memory_space<vmem>>) attributes {dimension_semantics = [#tpu.dimension_semantics<parallel>], iteration_bounds = array<i64: 1>, scalar_prefetch = 0 : i64, scratch_operands = 0 : i64, tpu.core_type = #tpu.core_type<tc>, window_params = [{transform_indices = @transform_0, window_bounds = array<i64: 16, 32>}, {pipeline_mode = #tpu.pipeline_mode<synchronous>, transform_indices = @transform_1, window_bounds = array<i64: 32, 128>}, {pipeline_mode = #tpu.pipeline_mode<synchronous>, transform_indices = @transform_2, window_bounds = array<i64: 1, 128>}, {pipeline_mode = #tpu.pipeline_mode<synchronous>, transform_indices = @transform_3, window_bounds = array<i64: 128, 128>}, {pipeline_mode = #tpu.pipeline_mode<synchronous>, transform_indices = @transform_4, window_bounds = array<i64: 1, 128>}, {transform_indices = @transform_5, window_bounds = array<i64: 16, 128>}]} {
    %c0 = arith.constant 0 : index
    %c0_0 = arith.constant 0 : index
    %0 = vector.load %arg1[%c0, %c0_0] : memref<16x32xf32, #tpu.memory_space<vmem>>, vector<16x32xf32>
    %c0_1 = arith.constant 0 : index
    %c0_2 = arith.constant 0 : index
    %1 = vector.load %arg2[%c0_1, %c0_2] : memref<32x128xf32, #tpu.memory_space<vmem>>, vector<32x128xf32>
    %cst = arith.constant dense<0.000000e+00> : vector<16x128xf32>
    %2 = tpu.matmul %0, %1, %cst {dimension_numbers = #tpu.dot_dimension_numbers<[1], [0], [0], [1], [0, 0, 1, 1], [], []>} : vector<16x32xf32>, vector<32x128xf32>, vector<16x128xf32> -> vector<16x128xf32>
    %c0_3 = arith.constant 0 : index
    %c0_4 = arith.constant 0 : index
    %3 = vector.load %arg3[%c0_3, %c0_4] : memref<1x128xf32, #tpu.memory_space<vmem>>, vector<1x128xf32>
    %4 = vector.broadcast %3 : vector<1x128xf32> to vector<16x128xf32>
    %5 = arith.addf %2, %4 : vector<16x128xf32>
    %cst_5 = arith.constant 0.000000e+00 : f32
    %6 = vector.broadcast %cst_5 : f32 to vector<16x128xf32>
    %7 = arith.maximumf %5, %6 : vector<16x128xf32>
    %c0_6 = arith.constant 0 : index
    %c0_7 = arith.constant 0 : index
    %8 = vector.load %arg4[%c0_6, %c0_7] : memref<128x128xf32, #tpu.memory_space<vmem>>, vector<128x128xf32>
    %cst_8 = arith.constant dense<0.000000e+00> : vector<16x128xf32>
    %9 = tpu.matmul %7, %8, %cst_8 {dimension_numbers = #tpu.dot_dimension_numbers<[1], [0], [0], [1], [0, 0, 1, 1], [], []>} : vector<16x128xf32>, vector<128x128xf32>, vector<16x128xf32> -> vector<16x128xf32>
    %c0_9 = arith.constant 0 : index
    %c0_10 = arith.constant 0 : index
    %10 = vector.load %arg5[%c0_9, %c0_10] : memref<1x128xf32, #tpu.memory_space<vmem>>, vector<1x128xf32>
    %11 = vector.broadcast %10 : vector<1x128xf32> to vector<16x128xf32>
    %12 = arith.addf %9, %11 : vector<16x128xf32>
    %c0_11 = arith.constant 0 : index
    %c0_12 = arith.constant 0 : index
    %13 = vector.load %arg6[%c0_11, %c0_12] : memref<16x128xf32, #tpu.memory_space<vmem>>, vector<16x128xf32>
    tpu.vector_store %arg6[%c0_11, %c0_12], %12 {strides = array<i32>} : memref<16x128xf32, #tpu.memory_space<vmem>>, vector<16x128xf32>,
    return
  }
  func.func @transform_0(%arg0: i32) -> (i32, i32) {
    %c0_i32 = arith.constant 0 : i32
    %c0_i32_0 = arith.constant 0 : i32
    return %arg0, %c0_i32 : i32, i32
  }
  func.func @transform_1(%arg0: i32) -> (i32, i32) {
    %c0_i32 = arith.constant 0 : i32
    %c0_i32_0 = arith.constant 0 : i32
    %c0_i32_1 = arith.constant 0 : i32
    return %c0_i32, %c0_i32_0 : i32, i32
  }
  func.func @transform_2(%arg0: i32) -> (i32, i32) {
    %c0_i32 = arith.constant 0 : i32
    %c0_i32_0 = arith.constant 0 : i32
    %c0_i32_1 = arith.constant 0 : i32
    return %c0_i32, %c0_i32_0 : i32, i32
  }
  func.func @transform_3(%arg0: i32) -> (i32, i32) {
    %c0_i32 = arith.constant 0 : i32
    %c0_i32_0 = arith.constant 0 : i32
    %c0_i32_1 = arith.constant 0 : i32
    return %c0_i32, %c0_i32_0 : i32, i32
  }
  func.func @transform_4(%arg0: i32) -> (i32, i32) {
    %c0_i32 = arith.constant 0 : i32
    %c0_i32_0 = arith.constant 0 : i32
    %c0_i32_1 = arith.constant 0 : i32
    return %c0_i32, %c0_i32_0 : i32, i32
  }
  func.func @transform_5(%arg0: i32) -> (i32, i32) {
    %c0_i32 = arith.constant 0 : i32
    %c0_i32_0 = arith.constant 0 : i32
    return %arg0, %c0_i32 : i32, i32
  }
}

</mosaic_0001>

<llo_original>
// kernel: tpu_custom_call.1
$region0: #{tpu_custom_call.1}
  #allocation0 [shape = 'u32[]', space=smem, size = 0x4, offset = 0x4, fixed_abs, tag = 'smem constant byte address 0x4 - core index']
  #allocation1 [shape = 'u32[144,128]{1,0:T(1,128)}', space=vmem, size = 0x12000, scoped, tag = 'internal scratch']
  %s0 = inlined_call_operand.hbm [shape: f32[16,32], index: 0, kind: input, shape index: {}]
  %s1 = inlined_call_operand.hbm [shape: f32[32,128], index: 1, kind: input, shape index: {}]
  %s2 = inlined_call_operand.vmem [shape: f32[1,128], index: 2, kind: input, shape index: {}]
  %s3 = inlined_call_operand.hbm [shape: f32[128,128], index: 3, kind: input, shape index: {}]
  %s4 = inlined_call_operand.vmem [shape: f32[1,128], index: 4, kind: input, shape index: {}]
  %s5 = inlined_call_operand.hbm [shape: f32[16,128], index: 5, kind: output, shape index: {}]
  %s6 = sld [smem:[#allocation0]]
  $region42: #{tpu_custom_call.1} parent=0
    _
  %s8 = ssub.s32 1, %s6
  %s9 = scalar_select 0, %s8, %s6
  $region1: #{tpu_custom_call.1} parent=0
    #allocation2 [shape = 'u8[8192]{0}', space=vmem, size = 0x2000, scoped, tag = 'input window, operand 0, single buffered']
    #allocation3 [shape = 's32[1]{0}', space=sflag, size = 0x4, scoped, tag = 'scoped memory for tpu_custom_call.1']
    #allocation4 [shape = 's32[1]{0}', space=sflag, size = 0x4, scoped, tag = 'scoped memory for tpu_custom_call.1']
    #allocation5 [shape = 'u8[16384]{0}', space=vmem, size = 0x4000, scoped, tag = 'input window, operand 1, single buffered']
    #allocation6 [shape = 's32[1]{0}', space=sflag, size = 0x4, scoped, tag = 'scoped memory for tpu_custom_call.1']
    #allocation7 [shape = 'u8[65536]{0}', space=vmem, size = 0x10000, scoped, tag = 'input window, operand 3, single buffered']
    #allocation8 [shape = 'u8[8192]{0}', space=vmem, size = 0x2000, scoped, tag = 'output window, operand 0, single buffered']
    %10 = vsyncpa [#allocation3], 0
    %11 = vsyncpa [#allocation6], 0
    %12 = vsyncpa [#allocation4], 0
    // Predicated region
    $region2: #{tpu_custom_call.1} parent=1 // pred_check
      _
    $region3: #{tpu_custom_call.1} parent=1 // pred_check_branch
      %14 = sbr.rel (0) target = $region5
    $region4: #{tpu_custom_call.1} parent=1 // pred_region
      %s16 = ssub.s32 256, 256
      %17 = vsyncadd [#allocation3], %s16
      %s18 = sshll.u32 [#allocation2], 4
      %s19 = int_to_ptr.vmem [resolvable:$true] %s18
      %24 = dma.hbm_to_vmem [thread:$0]  %s0, 256, %s19, [#allocation3], 128, 128, 8
    $region5: #{tpu_custom_call.1} parent=1 // pred_fallthru
      _
    // Predicated region
    $region6: #{tpu_custom_call.1} parent=1 // pred_check
      _
    $region7: #{tpu_custom_call.1} parent=1 // pred_check_branch
      %26 = sbr.rel (0) target = $region9
    $region8: #{tpu_custom_call.1} parent=1 // pred_region
      %s28 = ssub.s32 512, 512
      %29 = vsyncadd [#allocation6], %s28
      %s30 = sshll.u32 [#allocation5], 4
      %s31 = int_to_ptr.vmem [resolvable:$true] %s30
      %36 = dma.hbm_to_vmem [thread:$0]  %s1, 512, %s31, [#allocation6], 128, 128, 8
    $region9: #{tpu_custom_call.1} parent=1 // pred_fallthru
      _
    // Predicated region
    $region10: #{tpu_custom_call.1} parent=1 // pred_check
      _
    $region11: #{tpu_custom_call.1} parent=1 // pred_check_branch
      %38 = sbr.rel (0) target = $region13
    $region12: #{tpu_custom_call.1} parent=1 // pred_region
      _
    $region13: #{tpu_custom_call.1} parent=1 // pred_fallthru
      _
    // Predicated region
    $region14: #{tpu_custom_call.1} parent=1 // pred_check
      _
    $region15: #{tpu_custom_call.1} parent=1 // pred_check_branch
      %40 = sbr.rel (0) target = $region17
    $region16: #{tpu_custom_call.1} parent=1 // pred_region
      %s42 = ssub.s32 2048, 2048
      %43 = vsyncadd [#allocation6], %s42
      %s44 = sshll.u32 [#allocation7], 4
      %s45 = int_to_ptr.vmem [resolvable:$true] %s44
      %50 = dma.hbm_to_vmem [thread:$0]  %s3, 2048, %s45, [#allocation6], 128, 128, 8
    $region17: #{tpu_custom_call.1} parent=1 // pred_fallthru
      _
    // Predicated region
    $region18: #{tpu_custom_call.1} parent=1 // pred_check
      _
    $region19: #{tpu_custom_call.1} parent=1 // pred_check_branch
      %52 = sbr.rel (0) target = $region21
    $region20: #{tpu_custom_call.1} parent=1 // pred_region
      _
    $region21: #{tpu_custom_call.1} parent=1 // pred_fallthru
      _
    // Predicated region
    $region22: #{tpu_custom_call.1} parent=1 // pred_check
      _
    $region23: #{tpu_custom_call.1} parent=1 // pred_check_branch
      %54 = sbr.rel (0) target = $region25
    $region24: #{tpu_custom_call.1} parent=1 // pred_region
      %55 = dma.done [#allocation3], 256
    $region25: #{tpu_custom_call.1} parent=1 // pred_fallthru
      _
    // Predicated region
    $region26: #{tpu_custom_call.1} parent=1 // pred_check
      _
    $region27: #{tpu_custom_call.1} parent=1 // pred_check_branch
      %57 = sbr.rel (0) target = $region29
    $region28: #{tpu_custom_call.1} parent=1 // pred_region
      %58 = dma.done [#allocation6], 512
    $region29: #{tpu_custom_call.1} parent=1 // pred_fallthru
      _
    // Predicated region
    $region30: #{tpu_custom_call.1} parent=1 // pred_check
      _
    $region31: #{tpu_custom_call.1} parent=1 // pred_check_branch
      %60 = sbr.rel (0) target = $region33
    $region32: #{tpu_custom_call.1} parent=1 // pred_region
      %61 = dma.done [#allocation6], 2048
    $region33: #{tpu_custom_call.1} parent=1 // pred_fallthru
      _
    %v62 = vld [vmem:[#allocation2] sm:$0xff]
    %v63 = vld [vmem:[#allocation2 + $0x8] sm:$0xff]
    %v64 = vld [vmem:[#allocation5] sm:$0xff]
    %v65 = vld [vmem:[#allocation5 + $0x8] sm:$0xff]
    %v66 = vld [vmem:[#allocation5 + $0x10] sm:$0xff]
    %v67 = vld [vmem:[#allocation5 + $0x18] sm:$0xff]
    %v68 = vld [vmem:[%s2] sm:$0x1]
    %v70 = vlaneseq
    %v71 = vshrl.u32 %v70, 7
    %v72 = vsub.s32 0, %v71
    %v73 = vrot.slane %v68, %v72
    %vm75 = vcmask 261120
    %v77 = vsel %vm75, %v62, 0
    %v80 = vsel %vm75, %v63, 0
    %82 = vmatprep.subr.mxu0 0.0
    %83 = vmatpush1.msra.mxu0 %v64
    %84 = vmatprep.subr.mxu0 0.0
    %85 = vmatpush1.msra.mxu0 %v65
    %86 = vmatprep.subr.mxu0 0.0
    %87 = vmatpush1.msra.mxu0 %v66
    %88 = vmatprep.subr.mxu0 0.0
    %89 = vmatpush1.msra.mxu0 %v67
    %90 = vmatprep.subr.mxu0 0.0
    %91 = vmatpush1.msra.mxu0 0.0
    %92 = vmatprep.subr.mxu0 0.0
    %93 = vmatpush1.msra.mxu0 0.0
    %94 = vmatprep.subr.mxu0 0.0
    %95 = vmatpush1.msra.mxu0 0.0
    %96 = vmatprep.subr.mxu0 0.0
    %97 = vmatpush1.msra.mxu0 0.0
    %98 = vmatprep.subr.mxu0 0.0
    %99 = vmatpush1.msra.mxu0 0.0
    %100 = vmatprep.subr.mxu0 0.0
    %101 = vmatpush1.msra.mxu0 0.0
    %102 = vmatprep.subr.mxu0 0.0
    %103 = vmatpush1.msra.mxu0 0.0
    %104 = vmatprep.subr.mxu0 0.0
    %105 = vmatpush1.msra.mxu0 0.0
    %106 = vmatprep.subr.mxu0 0.0
    %107 = vmatpush1.msra.mxu0 0.0
    %108 = vmatprep.subr.mxu0 0.0
    %109 = vmatpush1.msra.mxu0 0.0
    %110 = vmatprep.subr.mxu0 0.0
    %111 = vmatpush1.msra.mxu0 0.0
    %112 = vmatprep.subr.mxu0 0.0
    %113 = vmatpush1.msra.mxu0 0.0
    %114 = vmatprep.subr.mxu0 0.0
    %115 = vmatpush1.msra.mxu0 0.0
    %116 = vmatprep.subr.mxu0 0.0
    %117 = vmatpush1.msra.mxu0 0.0
    %118 = vmatprep.subr.mxu0 0.0
    %119 = vmatpush1.msra.mxu0 0.0
    %120 = vmatprep.subr.mxu0 0.0
    %121 = vmatpush1.msra.mxu0 0.0
    %122 = vmatprep.subr.mxu0 0.0
    %123 = vmatpush1.msra.mxu0 0.0
    %124 = vmatprep.subr.mxu0 0.0
    %125 = vmatpush1.msra.mxu0 0.0
    %126 = vmatprep.subr.mxu0 0.0
    %127 = vmatpush1.msra.mxu0 0.0
    %128 = vmatprep.subr.mxu0 0.0
    %129 = vmatpush1.msra.mxu0 0.0
    %130 = vmatprep.subr.mxu0 0.0
    %131 = vmatpush1.msra.mxu0 0.0
    %132 = vmatprep.subr.mxu0 0.0
    %133 = vmatpush1.msra.mxu0 0.0
    %134 = vmatprep.subr.mxu0 0.0
    %135 = vmatpush1.msra.mxu0 0.0
    %136 = vmatprep.subr.mxu0 0.0
    %137 = vmatpush1.msra.mxu0 0.0
    %138 = vmatprep.subr.mxu0 0.0
    %139 = vmatpush1.msra.mxu0 0.0
    %140 = vmatprep.subr.mxu0 0.0
    %141 = vmatpush1.msra.mxu0 0.0
    %142 = vmatprep.subr.mxu0 0.0
    %143 = vmatpush1.msra.mxu0 0.0
    %144 = vmatprep.subr.mxu0 0.0
    %145 = vmatpush1.msra.mxu0 0.0
    %146 = vmatprep.mubr.f32.mxu0 0.0
    %147 = vmatmul.mubr.f32.gmra.mrb[0].mxu0 %v77
    %v148 = vpop.f32.mrb[0].mxu0
    %v149 = vadd.f32 %v73, %v148
    %v150 = vpop.f32.mrb[0].mxu0
    %151 = vmatprep.mubr.f32.mxu0 0.0
    %152 = vmatmul.mubr.f32.gmra.mrb[0].mxu0 %v80
    %v153 = vpop.f32.mrb[0].mxu0
    %v154 = vadd.f32 %v73, %v153
    %v155 = vpop.f32.mrb[0].mxu0
    %156 = vdwg.mxu0
    %v157 = vmax.f32 %v149, 0.0
    %v158 = vmax.f32 %v154, 0.0
    %v159 = vld [vmem:[#allocation7] sm:$0xff]
    %v160 = vld [vmem:[#allocation7 + $0x8] sm:$0xff]
    %v161 = vld [vmem:[#allocation7 + $0x10] sm:$0xff]
    %v162 = vld [vmem:[#allocation7 + $0x18] sm:$0xff]
    %v163 = vld [vmem:[#allocation7 + $0x20] sm:$0xff]
    %v164 = vld [vmem:[#allocation7 + $0x28] sm:$0xff]
    %v165 = vld [vmem:[#allocation7 + $0x30] sm:$0xff]
    %v166 = vld [vmem:[#allocation7 + $0x38] sm:$0xff]
    %v167 = vld [vmem:[#allocation7 + $0x40] sm:$0xff]
    %v168 = vld [vmem:[#allocation7 + $0x48] sm:$0xff]
    %v169 = vld [vmem:[#allocation7 + $0x50] sm:$0xff]
    %v170 = vld [vmem:[#allocation7 + $0x58] sm:$0xff]
    %v171 = vld [vmem:[#allocation7 + $0x60] sm:$0xff]
    %v172 = vld [vmem:[#allocation7 + $0x68] sm:$0xff]
    %v173 = vld [vmem:[#allocation7 + $0x70] sm:$0xff]
    %v174 = vld [vmem:[#allocation7 + $0x78] sm:$0xff]
    %v175 = vld [vmem:[%s4] sm:$0x1]
    %v177 = vlaneseq
    %v178 = vshrl.u32 %v177, 7
    %v179 = vsub.s32 0, %v178
    %v180 = vrot.slane %v175, %v179
    %182 = vmatprep.subr.mxu0 0.0
    %183 = vmatpush1.msra.mxu0 %v159
    %184 = vmatprep.subr.mxu0 0.0
    %185 = vmatpush1.msra.mxu0 %v160
    %186 = vmatprep.subr.mxu0 0.0
    %187 = vmatpush1.msra.mxu0 %v161
    %188 = vmatprep.subr.mxu0 0.0
    %189 = vmatpush1.msra.mxu0 %v162
    %190 = vmatprep.subr.mxu0 0.0
    %191 = vmatpush1.msra.mxu0 %v163
    %192 = vmatprep.subr.mxu0 0.0
    %193 = vmatpush1.msra.mxu0 %v164
    %194 = vmatprep.subr.mxu0 0.0
    %195 = vmatpush1.msra.mxu0 %v165
    %196 = vmatprep.subr.mxu0 0.0
    %197 = vmatpush1.msra.mxu0 %v166
    %198 = vmatprep.subr.mxu0 0.0
    %199 = vmatpush1.msra.mxu0 %v167
    %200 = vmatprep.subr.mxu0 0.0
    %201 = vmatpush1.msra.mxu0 %v168
    %202 = vmatprep.subr.mxu0 0.0
    %203 = vmatpush1.msra.mxu0 %v169
    %204 = vmatprep.subr.mxu0 0.0
    %205 = vmatpush1.msra.mxu0 %v170
    %206 = vmatprep.subr.mxu0 0.0
    %207 = vmatpush1.msra.mxu0 %v171
    %208 = vmatprep.subr.mxu0 0.0
    %209 = vmatpush1.msra.mxu0 %v172
    %210 = vmatprep.subr.mxu0 0.0
    %211 = vmatpush1.msra.mxu0 %v173
    %212 = vmatprep.subr.mxu0 0.0
    %213 = vmatpush1.msra.mxu0 %v174
    %214 = vmatprep.subr.mxu0 0.0
    %215 = vmatpush1.msra.mxu0 0.0
    %216 = vmatprep.subr.mxu0 0.0
    %217 = vmatpush1.msra.mxu0 0.0
    %218 = vmatprep.subr.mxu0 0.0
    %219 = vmatpush1.msra.mxu0 0.0
    %220 = vmatprep.subr.mxu0 0.0
    %221 = vmatpush1.msra.mxu0 0.0
    %222 = vmatprep.subr.mxu0 0.0
    %223 = vmatpush1.msra.mxu0 0.0
    %224 = vmatprep.subr.mxu0 0.0
    %225 = vmatpush1.msra.mxu0 0.0
    %226 = vmatprep.subr.mxu0 0.0
    %227 = vmatpush1.msra.mxu0 0.0
    %228 = vmatprep.subr.mxu0 0.0
    %229 = vmatpush1.msra.mxu0 0.0
    %230 = vmatprep.subr.mxu0 0.0
    %231 = vmatpush1.msra.mxu0 0.0
    %232 = vmatprep.subr.mxu0 0.0
    %233 = vmatpush1.msra.mxu0 0.0
    %234 = vmatprep.subr.mxu0 0.0
    %235 = vmatpush1.msra.mxu0 0.0
    %236 = vmatprep.subr.mxu0 0.0
    %237 = vmatpush1.msra.mxu0 0.0
    %238 = vmatprep.subr.mxu0 0.0
    %239 = vmatpush1.msra.mxu0 0.0
    %240 = vmatprep.subr.mxu0 0.0
    %241 = vmatpush1.msra.mxu0 0.0
    %242 = vmatprep.subr.mxu0 0.0
    %243 = vmatpush1.msra.mxu0 0.0
    %244 = vmatprep.subr.mxu0 0.0
    %245 = vmatpush1.msra.mxu0 0.0
    %246 = vmatprep.mubr.f32.mxu0 0.0
    %247 = vmatmul.mubr.f32.gmra.mrb[0].mxu0 %v157
    %v248 = vpop.f32.mrb[0].mxu0
    %v249 = vadd.f32 %v180, %v248
    %v250 = vpop.f32.mrb[0].mxu0
    %251 = vmatprep.mubr.f32.mxu0 0.0
    %252 = vmatmul.mubr.f32.gmra.mrb[0].mxu0 %v158
    %v253 = vpop.f32.mrb[0].mxu0
    %v254 = vadd.f32 %v180, %v253
    %v255 = vpop.f32.mrb[0].mxu0
    %256 = vdwg.mxu0
    %257 = vst [vmem:[#allocation8] sm:$0xff] %v249
    %258 = vst [vmem:[#allocation8 + $0x8] sm:$0xff] %v254
    // Predicated region
    $region34: #{tpu_custom_call.1} parent=1 // pred_check
      _
    $region35: #{tpu_custom_call.1} parent=1 // pred_check_branch
      %260 = sbr.rel (0) target = $region37
    $region36: #{tpu_custom_call.1} parent=1 // pred_region
      %s262 = ssub.s32 256, 256
      %263 = vsyncadd [#allocation4], %s262
      %s264 = sshll.u32 [#allocation8], 4
      %s265 = int_to_ptr.vmem [resolvable:$true] %s264
      %270 = dma.vmem_to_hbm [thread:$0]  %s265, 256, %s5, [#allocation4], 128, 128, 8
    $region37: #{tpu_custom_call.1} parent=1 // pred_fallthru
      _
    // Predicated region
    $region38: #{tpu_custom_call.1} parent=1 // pred_check
      _
    $region39: #{tpu_custom_call.1} parent=1 // pred_check_branch
      %272 = sbr.rel (0) target = $region41
    $region40: #{tpu_custom_call.1} parent=1 // pred_region
      %273 = dma.done [#allocation4], 256
    $region41: #{tpu_custom_call.1} parent=1 // pred_fallthru
      _
    %274 = vsyncpa [#allocation3], 1
    %275 = vsyncpa [#allocation6], 1
    %276 = vsyncpa [#allocation4], 1

// kernel: tpu_custom_call.1
$region0: #{tpu_custom_call.1}
  #allocation0 [shape = 'u32[]', space=smem, size = 0x4, offset = 0x4, fixed_abs, tag = 'smem constant byte address 0x4 - core index']
  #allocation1 [shape = 'u32[144,128]{1,0:T(1,128)}', space=vmem, size = 0x12000, scoped, tag = 'internal scratch']
  %s0 = inlined_call_operand.hbm [shape: f32[16,32], index: 0, kind: input, shape index: {}]
  %s1 = inlined_call_operand.hbm [shape: f32[32,128], index: 1, kind: input, shape index: {}]
  %s2 = inlined_call_operand.vmem [shape: f32[1,128], index: 2, kind: input, shape index: {}]
  %s3 = inlined_call_operand.hbm [shape: f32[128,128], index: 3, kind: input, shape index: {}]
  %s4 = inlined_call_operand.vmem [shape: f32[1,128], index: 4, kind: input, shape index: {}]
  %s5 = inlined_call_operand.hbm [shape: f32[16,128], index: 5, kind: output, shape index: {}]
  %s6 = sld [smem:[#allocation0]]
  $region42: #{tpu_custom_call.1} parent=0
    _
  %s8 = ssub.s32 1, %s6
  %s9 = scalar_select 0, %s8, %s6
  $region1: #{tpu_custom_call.1} parent=0
    #allocation2 [shape = 'u8[8192]{0}', space=vmem, size = 0x2000, scoped, tag = 'input window, operand 0, single buffered']
    #allocation3 [shape = 's32[1]{0}', space=sflag, size = 0x4, scoped, tag = 'scoped memory for tpu_custom_call.1']
    #allocation4 [shape = 's32[1]{0}', space=sflag, size = 0x4, scoped, tag = 'scoped memory for tpu_custom_call.1']
    #allocation5 [shape = 'u8[16384]{0}', space=vmem, size = 0x4000, scoped, tag = 'input window, operand 1, single buffered']
    #allocation6 [shape = 's32[1]{0}', space=sflag, size = 0x4, scoped, tag = 'scoped memory for tpu_custom_call.1']
    #allocation7 [shape = 'u8[65536]{0}', space=vmem, size = 0x10000, scoped, tag = 'input window, operand 3, single buffered']
    #allocation8 [shape = 'u8[8192]{0}', space=vmem, size = 0x2000, scoped, tag = 'output window, operand 0, single buffered']
    %10 = vsyncpa [#allocation3], 0
    %11 = vsyncpa [#allocation6], 0
    %12 = vsyncpa [#allocation4], 0
    // Predicated region
    $region2: #{tpu_custom_call.1} parent=1 // pred_check
      _
    $region3: #{tpu_custom_call.1} parent=1 // pred_check_branch
      %14 = sbr.rel (0) target = $region5
    $region4: #{tpu_custom_call.1} parent=1 // pred_region
      %s16 = ssub.s32 256, 256
      %17 = vsyncadd [#allocation3], %s16
      %s18 = sshll.u32 [#allocation2], 4
      %s19 = int_to_ptr.vmem [resolvable:$true] %s18
      %24 = dma.hbm_to_vmem [thread:$0]  %s0, 256, %s19, [#allocation3], 128, 128, 8
    $region5: #{tpu_custom_call.1} parent=1 // pred_fallthru
      _
    // Predicated region
    $region6: #{tpu_custom_call.1} parent=1 // pred_check
      _
    $region7: #{tpu_custom_call.1} parent=1 // pred_check_branch
      %26 = sbr.rel (0) target = $region9
    $region8: #{tpu_custom_call.1} parent=1 // pred_region
      %s28 = ssub.s32 512, 512
      %29 = vsyncadd [#allocation6], %s28
      %s30 = sshll.u32 [#allocation5], 4
      %s31 = int_to_ptr.vmem [resolvable:$true] %s30
      %36 = dma.hbm_to_vmem [thread:$0]  %s1, 512, %s31, [#allocation6], 128, 128, 8
    $region9: #{tpu_custom_call.1} parent=1 // pred_fallthru
      _
    // Predicated region
    $region10: #{tpu_custom_call.1} parent=1 // pred_check
      _
    $region11: #{tpu_custom_call.1} parent=1 // pred_check_branch
      %38 = sbr.rel (0) target = $region13
    $region12: #{tpu_custom_call.1} parent=1 // pred_region
      _
    $region13: #{tpu_custom_call.1} parent=1 // pred_fallthru
      _
    // Predicated region
    $region14: #{tpu_custom_call.1} parent=1 // pred_check
      _
    $region15: #{tpu_custom_call.1} parent=1 // pred_check_branch
      %40 = sbr.rel (0) target = $region17
    $region16: #{tpu_custom_call.1} parent=1 // pred_region
      %s42 = ssub.s32 2048, 2048
      %43 = vsyncadd [#allocation6], %s42
      %s44 = sshll.u32 [#allocation7], 4
      %s45 = int_to_ptr.vmem [resolvable:$true] %s44
      %50 = dma.hbm_to_vmem [thread:$0]  %s3, 2048, %s45, [#allocation6], 128, 128, 8
    $region17: #{tpu_custom_call.1} parent=1 // pred_fallthru
      _
    // Predicated region
    $region18: #{tpu_custom_call.1} parent=1 // pred_check
      _
    $region19: #{tpu_custom_call.1} parent=1 // pred_check_branch
      %52 = sbr.rel (0) target = $region21
    $region20: #{tpu_custom_call.1} parent=1 // pred_region
      _
    $region21: #{tpu_custom_call.1} parent=1 // pred_fallthru
      _
    // Predicated region
    $region22: #{tpu_custom_call.1} parent=1 // pred_check
      _
    $region23: #{tpu_custom_call.1} parent=1 // pred_check_branch
      %54 = sbr.rel (0) target = $region25
    $region24: #{tpu_custom_call.1} parent=1 // pred_region
      %55 = dma.done [#allocation3], 256
    $region25: #{tpu_custom_call.1} parent=1 // pred_fallthru
      _
    // Predicated region
    $region26: #{tpu_custom_call.1} parent=1 // pred_check
      _
    $region27: #{tpu_custom_call.1} parent=1 // pred_check_branch
      %57 = sbr.rel (0) target = $region29
    $region28: #{tpu_custom_call.1} parent=1 // pred_region
      %58 = dma.done [#allocation6], 512
    $region29: #{tpu_custom_call.1} parent=1 // pred_fallthru
      _
    // Predicated region
    $region30: #{tpu_custom_call.1} parent=1 // pred_check
      _
    $region31: #{tpu_custom_call.1} parent=1 // pred_check_branch
      %60 = sbr.rel (0) target = $region33
    $region32: #{tpu_custom_call.1} parent=1 // pred_region
      %61 = dma.done [#allocation6], 2048
    $region33: #{tpu_custom_call.1} parent=1 // pred_fallthru
      _
    %v62 = vld [vmem:[#allocation2] sm:$0xff]
    %v63 = vld [vmem:[#allocation2 + $0x8] sm:$0xff]
    %v64 = vld [vmem:[#allocation5] sm:$0xff]
    %v65 = vld [vmem:[#allocation5 + $0x8] sm:$0xff]
    %v66 = vld [vmem:[#allocation5 + $0x10] sm:$0xff]
    %v67 = vld [vmem:[#allocation5 + $0x18] sm:$0xff]
    %v68 = vld [vmem:[%s2] sm:$0x1]
    %v70 = vlaneseq
    %v71 = vshrl.u32 %v70, 7
    %v72 = vsub.s32 0, %v71
    %v73 = vrot.slane %v68, %v72
    %vm75 = vcmask 261120
    %v77 = vsel %vm75, %v62, 0
    %v80 = vsel %vm75, %v63, 0
    %82 = vmatprep.subr.mxu0 0.0
    %83 = vmatpush1.msra.mxu0 %v64
    %84 = vmatprep.subr.mxu0 0.0
    %85 = vmatpush1.msra.mxu0 %v65
    %86 = vmatprep.subr.mxu0 0.0
    %87 = vmatpush1.msra.mxu0 %v66
    %88 = vmatprep.subr.mxu0 0.0
    %89 = vmatpush1.msra.mxu0 %v67
    %90 = vmatprep.subr.mxu0 0.0
    %91 = vmatpush1.msra.mxu0 0.0
    %92 = vmatprep.subr.mxu0 0.0
    %93 = vmatpush1.msra.mxu0 0.0
    %94 = vmatprep.subr.mxu0 0.0
    %95 = vmatpush1.msra.mxu0 0.0
    %96 = vmatprep.subr.mxu0 0.0
    %97 = vmatpush1.msra.mxu0 0.0
    %98 = vmatprep.subr.mxu0 0.0
    %99 = vmatpush1.msra.mxu0 0.0
    %100 = vmatprep.subr.mxu0 0.0
    %101 = vmatpush1.msra.mxu0 0.0
    %102 = vmatprep.subr.mxu0 0.0
    %103 = vmatpush1.msra.mxu0 0.0
    %104 = vmatprep.subr.mxu0 0.0
    %105 = vmatpush1.msra.mxu0 0.0
    %106 = vmatprep.subr.mxu0 0.0
    %107 = vmatpush1.msra.mxu0 0.0
    %108 = vmatprep.subr.mxu0 0.0
    %109 = vmatpush1.msra.mxu0 0.0
    %110 = vmatprep.subr.mxu0 0.0
    %111 = vmatpush1.msra.mxu0 0.0
    %112 = vmatprep.subr.mxu0 0.0
    %113 = vmatpush1.msra.mxu0 0.0
    %114 = vmatprep.subr.mxu0 0.0
    %115 = vmatpush1.msra.mxu0 0.0
    %116 = vmatprep.subr.mxu0 0.0
    %117 = vmatpush1.msra.mxu0 0.0
    %118 = vmatprep.subr.mxu0 0.0
    %119 = vmatpush1.msra.mxu0 0.0
    %120 = vmatprep.subr.mxu0 0.0
    %121 = vmatpush1.msra.mxu0 0.0
    %122 = vmatprep.subr.mxu0 0.0
    %123 = vmatpush1.msra.mxu0 0.0
    %124 = vmatprep.subr.mxu0 0.0
    %125 = vmatpush1.msra.mxu0 0.0
    %126 = vmatprep.subr.mxu0 0.0
    %127 = vmatpush1.msra.mxu0 0.0
    %128 = vmatprep.subr.mxu0 0.0
    %129 = vmatpush1.msra.mxu0 0.0
    %130 = vmatprep.subr.mxu0 0.0
    %131 = vmatpush1.msra.mxu0 0.0
    %132 = vmatprep.subr.mxu0 0.0
    %133 = vmatpush1.msra.mxu0 0.0
    %134 = vmatprep.subr.mxu0 0.0
    %135 = vmatpush1.msra.mxu0 0.0
    %136 = vmatprep.subr.mxu0 0.0
    %137 = vmatpush1.msra.mxu0 0.0
    %138 = vmatprep.subr.mxu0 0.0
    %139 = vmatpush1.msra.mxu0 0.0
    %140 = vmatprep.subr.mxu0 0.0
    %141 = vmatpush1.msra.mxu0 0.0
    %142 = vmatprep.subr.mxu0 0.0
    %143 = vmatpush1.msra.mxu0 0.0
    %144 = vmatprep.subr.mxu0 0.0
    %145 = vmatpush1.msra.mxu0 0.0
    %146 = vmatprep.mubr.f32.mxu0 0.0
    %147 = vmatmul.mubr.f32.gmra.mrb[0].mxu0 %v77
    %v148 = vpop.f32.mrb[0].mxu0
    %v149 = vadd.f32 %v73, %v148
    %v150 = vpop.f32.mrb[0].mxu0
    %151 = vmatprep.mubr.f32.mxu0 0.0
    %152 = vmatmul.mubr.f32.gmra.mrb[0].mxu0 %v80
    %v153 = vpop.f32.mrb[0].mxu0
    %v154 = vadd.f32 %v73, %v153
    %v155 = vpop.f32.mrb[0].mxu0
    %156 = vdwg.mxu0
    %v157 = vmax.f32 %v149, 0.0
    %v158 = vmax.f32 %v154, 0.0
    %v159 = vld [vmem:[#allocation7] sm:$0xff]
    %v160 = vld [vmem:[#allocation7 + $0x8] sm:$0xff]
    %v161 = vld [vmem:[#allocation7 + $0x10] sm:$0xff]
    %v162 = vld [vmem:[#allocation7 + $0x18] sm:$0xff]
    %v163 = vld [vmem:[#allocation7 + $0x20] sm:$0xff]
    %v164 = vld [vmem:[#allocation7 + $0x28] sm:$0xff]
    %v165 = vld [vmem:[#allocation7 + $0x30] sm:$0xff]
    %v166 = vld [vmem:[#allocation7 + $0x38] sm:$0xff]
    %v167 = vld [vmem:[#allocation7 + $0x40] sm:$0xff]
    %v168 = vld [vmem:[#allocation7 + $0x48] sm:$0xff]
    %v169 = vld [vmem:[#allocation7 + $0x50] sm:$0xff]
    %v170 = vld [vmem:[#allocation7 + $0x58] sm:$0xff]
    %v171 = vld [vmem:[#allocation7 + $0x60] sm:$0xff]
    %v172 = vld [vmem:[#allocation7 + $0x68] sm:$0xff]
    %v173 = vld [vmem:[#allocation7 + $0x70] sm:$0xff]
    %v174 = vld [vmem:[#allocation7 + $0x78] sm:$0xff]
    %v175 = vld [vmem:[%s4] sm:$0x1]
    %v177 = vlaneseq
    %v178 = vshrl.u32 %v177, 7
    %v179 = vsub.s32 0, %v178
    %v180 = vrot.slane %v175, %v179
    %182 = vmatprep.subr.mxu0 0.0
    %183 = vmatpush1.msra.mxu0 %v159
    %184 = vmatprep.subr.mxu0 0.0
    %185 = vmatpush1.msra.mxu0 %v160
    %186 = vmatprep.subr.mxu0 0.0
    %187 = vmatpush1.msra.mxu0 %v161
    %188 = vmatprep.subr.mxu0 0.0
    %189 = vmatpush1.msra.mxu0 %v162
    %190 = vmatprep.subr.mxu0 0.0
    %191 = vmatpush1.msra.mxu0 %v163
    %192 = vmatprep.subr.mxu0 0.0
    %193 = vmatpush1.msra.mxu0 %v164
    %194 = vmatprep.subr.mxu0 0.0
    %195 = vmatpush1.msra.mxu0 %v165
    %196 = vmatprep.subr.mxu0 0.0
    %197 = vmatpush1.msra.mxu0 %v166
    %198 = vmatprep.subr.mxu0 0.0
    %199 = vmatpush1.msra.mxu0 %v167
    %200 = vmatprep.subr.mxu0 0.0
    %201 = vmatpush1.msra.mxu0 %v168
    %202 = vmatprep.subr.mxu0 0.0
    %203 = vmatpush1.msra.mxu0 %v169
    %204 = vmatprep.subr.mxu0 0.0
    %205 = vmatpush1.msra.mxu0 %v170
    %206 = vmatprep.subr.mxu0 0.0
    %207 = vmatpush1.msra.mxu0 %v171
    %208 = vmatprep.subr.mxu0 0.0
    %209 = vmatpush1.msra.mxu0 %v172
    %210 = vmatprep.subr.mxu0 0.0
    %211 = vmatpush1.msra.mxu0 %v173
    %212 = vmatprep.subr.mxu0 0.0
    %213 = vmatpush1.msra.mxu0 %v174
    %214 = vmatprep.subr.mxu0 0.0
    %215 = vmatpush1.msra.mxu0 0.0
    %216 = vmatprep.subr.mxu0 0.0
    %217 = vmatpush1.msra.mxu0 0.0
    %218 = vmatprep.subr.mxu0 0.0
    %219 = vmatpush1.msra.mxu0 0.0
    %220 = vmatprep.subr.mxu0 0.0
    %221 = vmatpush1.msra.mxu0 0.0
    %222 = vmatprep.subr.mxu0 0.0
    %223 = vmatpush1.msra.mxu0 0.0
    %224 = vmatprep.subr.mxu0 0.0
    %225 = vmatpush1.msra.mxu0 0.0
    %226 = vmatprep.subr.mxu0 0.0
    %227 = vmatpush1.msra.mxu0 0.0
    %228 = vmatprep.subr.mxu0 0.0
    %229 = vmatpush1.msra.mxu0 0.0
    %230 = vmatprep.subr.mxu0 0.0
    %231 = vmatpush1.msra.mxu0 0.0
    %232 = vmatprep.subr.mxu0 0.0
    %233 = vmatpush1.msra.mxu0 0.0
    %234 = vmatprep.subr.mxu0 0.0
    %235 = vmatpush1.msra.mxu0 0.0
    %236 = vmatprep.subr.mxu0 0.0
    %237 = vmatpush1.msra.mxu0 0.0
    %238 = vmatprep.subr.mxu0 0.0
    %239 = vmatpush1.msra.mxu0 0.0
    %240 = vmatprep.subr.mxu0 0.0
    %241 = vmatpush1.msra.mxu0 0.0
    %242 = vmatprep.subr.mxu0 0.0
    %243 = vmatpush1.msra.mxu0 0.0
    %244 = vmatprep.subr.mxu0 0.0
    %245 = vmatpush1.msra.mxu0 0.0
    %246 = vmatprep.mubr.f32.mxu0 0.0
    %247 = vmatmul.mubr.f32.gmra.mrb[0].mxu0 %v157
    %v248 = vpop.f32.mrb[0].mxu0
    %v249 = vadd.f32 %v180, %v248
    %v250 = vpop.f32.mrb[0].mxu0
    %251 = vmatprep.mubr.f32.mxu0 0.0
    %252 = vmatmul.mubr.f32.gmra.mrb[0].mxu0 %v158
    %v253 = vpop.f32.mrb[0].mxu0
    %v254 = vadd.f32 %v180, %v253
    %v255 = vpop.f32.mrb[0].mxu0
    %256 = vdwg.mxu0
    %257 = vst [vmem:[#allocation8] sm:$0xff] %v249
    %258 = vst [vmem:[#allocation8 + $0x8] sm:$0xff] %v254
    // Predicated region
    $region34: #{tpu_custom_call.1} parent=1 // pred_check
      _
    $region35: #{tpu_custom_call.1} parent=1 // pred_check_branch
      %260 = sbr.rel (0) target = $region37
    $region36: #{tpu_custom_call.1} parent=1 // pred_region
      %s262 = ssub.s32 256, 256
      %263 = vsyncadd [#allocation4], %s262
      %s264 = sshll.u32 [#allocation8], 4
      %s265 = int_to_ptr.vmem [resolvable:$true] %s264
      %270 = dma.vmem_to_hbm [thread:$0]  %s265, 256, %s5, [#allocation4], 128, 128, 8
    $region37: #{tpu_custom_call.1} parent=1 // pred_fallthru
      _
    // Predicated region
    $region38: #{tpu_custom_call.1} parent=1 // pred_check
      _
    $region39: #{tpu_custom_call.1} parent=1 // pred_check_branch
      %272 = sbr.rel (0) target = $region41
    $region40: #{tpu_custom_call.1} parent=1 // pred_region
      %273 = dma.done [#allocation4], 256
    $region41: #{tpu_custom_call.1} parent=1 // pred_fallthru
      _
    %274 = vsyncpa [#allocation3], 1
    %275 = vsyncpa [#allocation6], 1
    %276 = vsyncpa [#allocation4], 1

</llo_original>
